<compile_context>
chip_gen: v7x
topology: tpu7x:2x2x1
jax: 0.10.0
libtpu: 0.0.40
codegen_flags: <defaults>
</compile_context>

<pallas_src>
import jax
import jax.numpy as jnp
from jax.experimental import pallas as pl
from jax.experimental.pallas import tpu as pltpu


def _multi_input_kernel(x1_ref, x2_ref, w1_ref, w2_ref,
                        b1_ref, b2_ref, x3_ref, o_ref):
    """Fused dense1(x1) + dense2(x2) + x3.

    x1_ref, x2_ref : (B, IN) VMEM   activations
    w1_ref, w2_ref : (1, IN) VMEM   Linear weight rows (out_features == 1)
    b1_ref, b2_ref : (1,)    SMEM   Linear biases
    x3_ref         : (1,)    SMEM   scalar kwarg x3
    o_ref          : (B, 1)  VMEM   output
    """
    # VPU: two row-broadcast multiplies + add, co-issued in the same bundles.
    prod = x1_ref[...] * w1_ref[...] + x2_ref[...] * w2_ref[...]      # (B, IN)
    # XLU: single lane reduce -> (B, 1).
    acc = jnp.sum(prod, axis=-1, keepdims=True)
    bias = b1_ref[0] + b2_ref[0] + x3_ref[0]                          # scalar path
    o_ref[...] = (acc + bias).astype(o_ref.dtype)


def multiple_input_with_kwargs_net(x1, x2, w1, b1, w2, b2, x3=10.0):
    """JAX wrapper mirroring MultipleInputWithKwargsNet.forward(x1, x2, x3=10).

    w1, w2: (1, 10) PyTorch Linear weights; b1, b2: (1,) biases; x3 scalar kwarg.
    No tensor prep happens here: all operands are handed to the kernel as-is.
    """
    B = x1.shape[0]
    x3_arr = jnp.asarray(x3, dtype=jnp.float32).reshape((1,))

    vmem = pl.BlockSpec(memory_space=pltpu.MemorySpace.VMEM)
    smem = pl.BlockSpec(memory_space=pltpu.MemorySpace.SMEM)

    return pl.pallas_call(
        _multi_input_kernel,
        out_shape=jax.ShapeDtypeStruct((B, 1), jnp.float32),
        in_specs=[
            vmem,   # x1 (B, IN)
            vmem,   # x2 (B, IN)
            vmem,   # w1 (1, IN)
            vmem,   # w2 (1, IN)
            smem,   # b1 (1,)
            smem,   # b2 (1,)
            smem,   # x3 (1,)
        ],
        out_specs=pl.BlockSpec(memory_space=pltpu.MemorySpace.VMEM),
    )(x1, x2, w1, w2, b1, b2, x3_arr)


if __name__ == "__main__":
    key = jax.random.PRNGKey(0)
    k_x1, k_x2, k_w1, k_b1, k_w2, k_b2 = jax.random.split(key, 6)

    B, IN, OUT = 8, 10, 1

    # Same shapes as nn.Linear(10, 1): weight (1, 10), bias (1,);
    # values ~ U(-1/sqrt(10), 1/sqrt(10)) like PyTorch default init.
    bound = 1.0 / (IN ** 0.5)
    w1 = jax.random.uniform(k_w1, (OUT, IN), jnp.float32, -bound, bound)
    b1 = jax.random.uniform(k_b1, (OUT,), jnp.float32, -bound, bound)
    w2 = jax.random.uniform(k_w2, (OUT, IN), jnp.float32, -bound, bound)
    b2 = jax.random.uniform(k_b2, (OUT,), jnp.float32, -bound, bound)

    x1 = jax.random.normal(k_x1, (B, IN), jnp.float32)
    x2 = jax.random.normal(k_x2, (B, IN), jnp.float32)
    x3 = 10.0  # default kwarg in the PyTorch module

    out = multiple_input_with_kwargs_net(x1, x2, w1, b1, w2, b2, x3)
    out = jax.block_until_ready(out)

    # Reference check in plain JAX (same math as the PyTorch forward).
    ref = x1 @ w1.T + b1 + x2 @ w2.T + b2 + x3
    assert out.shape == (B, OUT)
    assert jnp.allclose(out, ref, atol=1e-5, rtol=1e-5)

    print("KERNEL_OK")
</pallas_src>

<mosaic_0001>
module attributes {stable_mosaic.version = 11 : i64} {
  func.func @_multi_input_kernel(%arg0: memref<8x10xf32, #tpu.memory_space<vmem>>, %arg1: memref<8x10xf32, #tpu.memory_space<vmem>>, %arg2: memref<1x10xf32, #tpu.memory_space<vmem>>, %arg3: memref<1x10xf32, #tpu.memory_space<vmem>>, %arg4: memref<1xf32, #tpu.memory_space<smem>>, %arg5: memref<1xf32, #tpu.memory_space<smem>>, %arg6: memref<1xf32, #tpu.memory_space<smem>>, %arg7: memref<8x1xf32, #tpu.memory_space<vmem>>) attributes {dimension_semantics = [], scalar_prefetch = 0 : i64, scratch_operands = 0 : i64, tpu.core_type = #tpu.core_type<tc>} {
    %c0 = arith.constant 0 : index
    %c0_0 = arith.constant 0 : index
    %0 = vector.load %arg0[%c0, %c0_0] : memref<8x10xf32, #tpu.memory_space<vmem>>, vector<8x10xf32>
    %c0_1 = arith.constant 0 : index
    %c0_2 = arith.constant 0 : index
    %1 = vector.load %arg2[%c0_1, %c0_2] : memref<1x10xf32, #tpu.memory_space<vmem>>, vector<1x10xf32>
    %2 = vector.broadcast %1 : vector<1x10xf32> to vector<8x10xf32>
    %3 = arith.mulf %0, %2 : vector<8x10xf32>
    %c0_3 = arith.constant 0 : index
    %c0_4 = arith.constant 0 : index
    %4 = vector.load %arg1[%c0_3, %c0_4] : memref<8x10xf32, #tpu.memory_space<vmem>>, vector<8x10xf32>
    %c0_5 = arith.constant 0 : index
    %c0_6 = arith.constant 0 : index
    %5 = vector.load %arg3[%c0_5, %c0_6] : memref<1x10xf32, #tpu.memory_space<vmem>>, vector<1x10xf32>
    %6 = vector.broadcast %5 : vector<1x10xf32> to vector<8x10xf32>
    %7 = arith.mulf %4, %6 : vector<8x10xf32>
    %8 = arith.addf %3, %7 : vector<8x10xf32>
    %cst = arith.constant dense<0.000000e+00> : vector<8xf32>
    %9 = vector.multi_reduction <add>, %8, %cst [1] : vector<8x10xf32> to vector<8xf32>
    %10 = vector.shape_cast %9 : vector<8xf32> to vector<8x1xf32>
    %c0_7 = arith.constant 0 : index
    %11 = memref.load %arg4[%c0_7] : memref<1xf32, #tpu.memory_space<smem>>
    %c0_8 = arith.constant 0 : index
    %12 = memref.load %arg5[%c0_8] : memref<1xf32, #tpu.memory_space<smem>>
    %13 = arith.addf %11, %12 : f32
    %c0_9 = arith.constant 0 : index
    %14 = memref.load %arg6[%c0_9] : memref<1xf32, #tpu.memory_space<smem>>
    %15 = arith.addf %13, %14 : f32
    %16 = vector.broadcast %15 : f32 to vector<8x1xf32>
    %17 = arith.addf %10, %16 : vector<8x1xf32>
    %c0_10 = arith.constant 0 : index
    %c0_11 = arith.constant 0 : index
    %18 = vector.load %arg7[%c0_10, %c0_11] : memref<8x1xf32, #tpu.memory_space<vmem>>, vector<8x1xf32>
    tpu.vector_store %arg7[%c0_10, %c0_11], %17 {strides = array<i32>} : memref<8x1xf32, #tpu.memory_space<vmem>>, vector<8x1xf32>,
    return
  }
}

</mosaic_0001>

<llo_original>
// kernel: tpu_custom_call.1
$region0: #{tpu_custom_call.1}
  #allocation0 [shape = 'u32[]', space=smem, size = 0x4, offset = 0x4, fixed_abs, tag = 'smem constant byte address 0x4 - core index']
  #allocation1 [shape = 'u32[144,128]{1,0:T(1,128)}', space=vmem, size = 0x12000, scoped, tag = 'internal scratch']
  #allocation2 [shape = 'f32[1]{0:T(128)S(6)}', space=smem, size = 0x200, scoped, tag = 'scoped memory for tpu_custom_call.1']
  #allocation3 [shape = 'f32[1]{0:T(128)S(6)}', space=smem, size = 0x200, scoped, tag = 'scoped memory for tpu_custom_call.1']
  #allocation4 [shape = 'f32[1]{0:T(128)S(6)}', space=smem, size = 0x200, scoped, tag = 'scoped memory for tpu_custom_call.1']
  %s0 = inlined_call_operand.vmem [shape: f32[8,10], index: 0, kind: input, shape index: {}]
  %s1 = inlined_call_operand.hbm [shape: f32[8,10], index: 1, kind: input, shape index: {}]
  %s2 = inlined_call_operand.vmem [shape: f32[1,10], index: 2, kind: input, shape index: {}]
  %s3 = inlined_call_operand.vmem [shape: f32[1,10], index: 3, kind: input, shape index: {}]
  %s4 = inlined_call_operand.<no memory space> [shape: f32[1], index: 4, kind: input, shape index: {}]
  %s5 = inlined_call_operand.<no memory space> [shape: f32[1], index: 5, kind: input, shape index: {}]
  %s6 = inlined_call_operand.<no memory space> [shape: f32[1], index: 6, kind: input, shape index: {}]
  %s7 = inlined_call_operand.vmem [shape: f32[8,1], index: 7, kind: output, shape index: {}]
  %s8 = sld [smem:[#allocation0]]
  $region42: #{tpu_custom_call.1} parent=0
    _
  %s10 = ssub.s32 1, %s8
  %s11 = scalar_select 0, %s10, %s8
  %12 = sst [smem:[#allocation2]] %s4
  %13 = sst [smem:[#allocation3]] %s5
  %14 = sst [smem:[#allocation4]] %s6
  $region1: #{tpu_custom_call.1} parent=0
    #allocation5 [shape = 'u8[4096]{0}', space=vmem, size = 0x1000, scoped, tag = 'input window, operand 1, single buffered']
    #allocation6 [shape = 's32[1]{0}', space=sflag, size = 0x4, scoped, tag = 'scoped memory for tpu_custom_call.1']
    %15 = vsyncpa [#allocation6], 0
    // Predicated region
    $region2: #{tpu_custom_call.1} parent=1 // pred_check
      _
    $region3: #{tpu_custom_call.1} parent=1 // pred_check_branch
      %17 = sbr.rel (0) target = $region5
    $region4: #{tpu_custom_call.1} parent=1 // pred_region
      _
    $region5: #{tpu_custom_call.1} parent=1 // pred_fallthru
      _
    // Predicated region
    $region6: #{tpu_custom_call.1} parent=1 // pred_check
      _
    $region7: #{tpu_custom_call.1} parent=1 // pred_check_branch
      %19 = sbr.rel (0) target = $region9
    $region8: #{tpu_custom_call.1} parent=1 // pred_region
      %s21 = ssub.s32 128, 128
      %22 = vsyncadd [#allocation6], %s21
      %s24 = sshll.u32 [#allocation5], 4
      %s25 = int_to_ptr.vmem [resolvable:$true] %s24
      %27 = dma.hbm_to_vmem [thread:$0]  %s1, 128, %s25, [#allocation6]
    $region9: #{tpu_custom_call.1} parent=1 // pred_fallthru
      _
    // Predicated region
    $region10: #{tpu_custom_call.1} parent=1 // pred_check
      _
    $region11: #{tpu_custom_call.1} parent=1 // pred_check_branch
      %29 = sbr.rel (0) target = $region13
    $region12: #{tpu_custom_call.1} parent=1 // pred_region
      _
    $region13: #{tpu_custom_call.1} parent=1 // pred_fallthru
      _
    // Predicated region
    $region14: #{tpu_custom_call.1} parent=1 // pred_check
      _
    $region15: #{tpu_custom_call.1} parent=1 // pred_check_branch
      %31 = sbr.rel (0) target = $region17
    $region16: #{tpu_custom_call.1} parent=1 // pred_region
      _
    $region17: #{tpu_custom_call.1} parent=1 // pred_fallthru
      _
    // Predicated region
    $region18: #{tpu_custom_call.1} parent=1 // pred_check
      _
    $region19: #{tpu_custom_call.1} parent=1 // pred_check_branch
      %33 = sbr.rel (0) target = $region21
    $region20: #{tpu_custom_call.1} parent=1 // pred_region
      _
    $region21: #{tpu_custom_call.1} parent=1 // pred_fallthru
      _
    // Predicated region
    $region22: #{tpu_custom_call.1} parent=1 // pred_check
      _
    $region23: #{tpu_custom_call.1} parent=1 // pred_check_branch
      %35 = sbr.rel (0) target = $region25
    $region24: #{tpu_custom_call.1} parent=1 // pred_region
      _
    $region25: #{tpu_custom_call.1} parent=1 // pred_fallthru
      _
    // Predicated region
    $region26: #{tpu_custom_call.1} parent=1 // pred_check
      _
    $region27: #{tpu_custom_call.1} parent=1 // pred_check_branch
      %37 = sbr.rel (0) target = $region29
    $region28: #{tpu_custom_call.1} parent=1 // pred_region
      _
    $region29: #{tpu_custom_call.1} parent=1 // pred_fallthru
      _
    // Predicated region
    $region30: #{tpu_custom_call.1} parent=1 // pred_check
      _
    $region31: #{tpu_custom_call.1} parent=1 // pred_check_branch
      %39 = sbr.rel (0) target = $region33
    $region32: #{tpu_custom_call.1} parent=1 // pred_region
      %40 = dma.done [#allocation6], 128
    $region33: #{tpu_custom_call.1} parent=1 // pred_fallthru
      _
    %v41 = vld [vmem:[%s0] sm:$0xff]
    %v42 = vld [vmem:[%s2] sm:$0x1]
    %v44 = vlaneseq
    %v45 = vshrl.u32 %v44, 7
    %v46 = vsub.s32 0, %v45
    %v47 = vrot.slane %v42, %v46
    %v49 = vmul.f32 %v41, %v47
    %v50 = vld [vmem:[#allocation5] sm:$0xff]
    %v51 = vld [vmem:[%s3] sm:$0x1]
    %v53 = vlaneseq
    %v54 = vshrl.u32 %v53, 7
    %v55 = vsub.s32 0, %v54
    %v56 = vrot.slane %v51, %v55
    %v58 = vmul.f32 %v50, %v56
    %v59 = vadd.f32 %v49, %v58
    %vm60 = vcmask 80896
    %v61 = vsel %vm60, %v59, 0.0
    %62 = vadd.xlane.f32.xlu0 %v61
    %v63 = vpop.xlane.xlu0 %62
    %s64 = sld [smem:[#allocation2]]
    %s65 = sld [smem:[#allocation3]]
    %s66 = sadd.f32 %s64, %s65
    %s67 = sld [smem:[#allocation4]]
    %s68 = sadd.f32 %s66, %s67
    %v69 = vstv %s68
    %v70 = vadd.f32 %v63, %v69
    %vm71 = vcmask 7168
    %72 = vst.msk [vmem:[%s7] sm:$0xff] %vm71, %v70
    // Predicated region
    $region34: #{tpu_custom_call.1} parent=1 // pred_check
      _
    $region35: #{tpu_custom_call.1} parent=1 // pred_check_branch
      %74 = sbr.rel (0) target = $region37
    $region36: #{tpu_custom_call.1} parent=1 // pred_region
      _
    $region37: #{tpu_custom_call.1} parent=1 // pred_fallthru
      _
    // Predicated region
    $region38: #{tpu_custom_call.1} parent=1 // pred_check
      _
    $region39: #{tpu_custom_call.1} parent=1 // pred_check_branch
      %76 = sbr.rel (0) target = $region41
    $region40: #{tpu_custom_call.1} parent=1 // pred_region
      _
    $region41: #{tpu_custom_call.1} parent=1 // pred_fallthru
      _
    %77 = vsyncpa [#allocation6], 1

</llo_original>
